<compile_context>
chip_gen: v7x
topology: tpu7x:2x2x1
jax: 0.10.0
libtpu: 0.0.40
codegen_flags: <defaults>
</compile_context>

<pallas_src>
import jax
import jax.numpy as jnp
from jax import lax
from jax.experimental import pallas as pl
from jax.experimental.pallas import tpu as pltpu
import numpy as np


def _round_up(x, m):
    return (x + m - 1) // m * m


# ----------------------------------------------------------------------------
# Kernel 1: multi-operand GEMM + bias:  sum_i x_i @ w_i + b
# Used for: layer-0 input projection, layer>=1 input projection (split-K pair, which
# absorbs the fwd/bwd concat), and the bias-free fc (zero bias).
# Grid over (M tiles, N tiles); weights stay resident along M.
# ----------------------------------------------------------------------------
def _make_gemm_kernel(n_in):
    def kernel(*refs):
        x_refs = refs[:n_in]
        w_refs = refs[n_in:2 * n_in]
        b_ref = refs[2 * n_in]
        o_ref = refs[2 * n_in + 1]
        acc = jnp.dot(x_refs[0][...], w_refs[0][...], preferred_element_type=jnp.float32)
        for xr, wr in zip(x_refs[1:], w_refs[1:]):
            acc = acc + jnp.dot(xr[...], wr[...], preferred_element_type=jnp.float32)
        o_ref[...] = (acc + b_ref[...]).astype(o_ref.dtype)
    return kernel


def gemm_multi(xs, ws, bias, *, tile_m=512, tile_n=2048, mxu_dtype=jnp.bfloat16):
    """xs[i]: (M, K_i) f32, ws[i]: (K_i, N), bias: (1, N) f32 -> (M, N) f32.
    MXU operands in mxu_dtype (bf16 halves DMA/VMEM bytes), f32 accumulation."""
    n_in = len(xs)
    M = xs[0].shape[0]
    N = ws[0].shape[1]

    tm = min(tile_m, _round_up(M, 8))
    Mp = _round_up(M, tm)

    # Lane tile: full N when small, else a 128-multiple divisor of N (lane-dense stores).
    if N <= tile_n or N % 128 != 0:
        tn = N
    else:
        tn = tile_n
        while tn > 128 and N % tn != 0:
            tn //= 2
        if N % tn != 0:
            tn = N

    xs_c = [jnp.pad(x, ((0, Mp - M), (0, 0))).astype(mxu_dtype) if Mp != M
            else x.astype(mxu_dtype) for x in xs]
    ws_c = [w.astype(mxu_dtype) for w in ws]
    bias = bias.astype(jnp.float32)

    dsize = jnp.dtype(mxu_dtype).itemsize
    needed = 2 * (sum(tm * x.shape[1] for x in xs_c) * dsize
                  + sum(w.shape[0] * tn for w in ws_c) * dsize
                  + tn * 4 + tm * tn * 4)
    vmem_limit = int(min(max(needed + (4 << 20), 32 << 20), 64 << 20))

    in_specs = []
    for x in xs_c:
        in_specs.append(pl.BlockSpec((tm, x.shape[1]), lambda i, j: (i, 0)))
    for w in ws_c:
        in_specs.append(pl.BlockSpec((w.shape[0], tn), lambda i, j: (0, j)))
    in_specs.append(pl.BlockSpec((1, tn), lambda i, j: (0, j)))

    out = pl.pallas_call(
        _make_gemm_kernel(n_in),
        out_shape=jax.ShapeDtypeStruct((Mp, N), jnp.float32),
        grid_spec=pltpu.PrefetchScalarGridSpec(
            num_scalar_prefetch=0,
            grid=(Mp // tm, N // tn),       # N innermost -> x block re-used across N tiles
            in_specs=in_specs,
            out_specs=pl.BlockSpec((tm, tn), lambda i, j: (i, j)),
        ),
        compiler_params=pltpu.CompilerParams(
            dimension_semantics=("parallel", "parallel"),
            vmem_limit_bytes=vmem_limit),
    )(*xs_c, *ws_c, bias)
    return out[:M]


# ----------------------------------------------------------------------------
# Kernel 2: bidirectional LSTM recurrence, time-chunked.
# grid=(num_chunks,) ("arbitrary": h/c state carries across chunks in VMEM scratch).
# Each in-kernel step advances BOTH directions (fwd at t, bwd at T-1-t): two independent
# dependence chains interleave on a single TensorCore.
#
#   lens_ref : (B, 1)  int32   valid iff t < len
#   xgf_ref  : (Tc, B, 4H)     x-projection, fwd lane half, chunk c
#   xgb_ref  : (Tc, B, 4H)     x-projection, bwd lane half, chunk C-1-c
#   whh*_ref : (H, 4H)         recurrent weights, W_hh^T, gates lane-concat [i|f|g|o]
#   outf_ref : (Tc, B, H)      chunk c
#   outb_ref : (Tc, B, H)      chunk C-1-c
# ----------------------------------------------------------------------------
def _bilstm_chunk_kernel(lens_ref, xgf_ref, xgb_ref, whhf_ref, whhb_ref,
                         outf_ref, outb_ref, hf_sc, cf_sc, hb_sc, cb_sc):
    c = pl.program_id(0)
    n_chunks = pl.num_programs(0)
    Tc, B, H = outf_ref.shape
    T_total = n_chunks * Tc

    @pl.when(c == 0)
    def _():
        hf_sc[...] = jnp.zeros_like(hf_sc)
        cf_sc[...] = jnp.zeros_like(cf_sc)
        hb_sc[...] = jnp.zeros_like(hb_sc)
        cb_sc[...] = jnp.zeros_like(cb_sc)

    lens = lens_ref[...]                      # (B, 1) int32
    whh_f = whhf_ref[...]                     # hoist weight loads out of the loop
    whh_b = whhb_ref[...]
    t0 = c * Tc

    def cell(xg_row, h_prev, c_prev, whh, t):
        # One fused dot per direction per step; gate slices are lane-aligned when 4H % 128 == 0.
        g = xg_row + jnp.dot(h_prev, whh, preferred_element_type=jnp.float32)
        i_g = jax.nn.sigmoid(g[:, 0 * H:1 * H])
        f_g = jax.nn.sigmoid(g[:, 1 * H:2 * H])
        g_g = jnp.tanh(g[:, 2 * H:3 * H])
        o_g = jax.nn.sigmoid(g[:, 3 * H:4 * H])
        c_new = f_g * c_prev + i_g * g_g
        h_new = o_g * jnp.tanh(c_new)
        valid = t < lens                      # (B, 1) bool; packed-seq: freeze state, emit 0
        return (jnp.where(valid, h_new, h_prev),
                jnp.where(valid, c_new, c_prev),
                jnp.where(valid, h_new, 0.0))

    def step(s, carry):
        t_f = t0 + s                          # forward global time
        t_b = T_total - 1 - t_f               # backward global time
        sb = Tc - 1 - s                       # local index of t_b inside its chunk

        hf_new, cf_new, of = cell(xgf_ref[s], hf_sc[...], cf_sc[...], whh_f, t_f)
        hb_new, cb_new, ob = cell(xgb_ref[sb], hb_sc[...], cb_sc[...], whh_b, t_b)

        hf_sc[...] = hf_new; cf_sc[...] = cf_new
        hb_sc[...] = hb_new; cb_sc[...] = cb_new
        outf_ref[s] = of.astype(outf_ref.dtype)
        outb_ref[sb] = ob.astype(outb_ref.dtype)
        return carry

    lax.fori_loop(0, Tc, step, 0, unroll=min(Tc, 4))


def _choose_time_chunk(T, B, H, budget_bytes=24 << 20):
    """Pick the time-chunk so the double-buffered xg+out chunks of both directions stay
    under `budget_bytes` (sized for v7x's 64 MiB physical VMEM with headroom)."""
    per_t = 2 * 2 * (4 * H + H) * B * 4       # dbl-buffered, 2 dirs, xg(4H)+out(H), f32
    return int(max(1, min(T, budget_bytes // per_t)))


def bilstm_recurrence(xg, lens_col, whh_f, whh_b, time_chunk):
    """xg: (Tp, B, 8H) f32 with lanes [fwd i|f|g|o | bwd i|f|g|o]; lens_col: (B,1) int32;
    whh_*: (H, 4H) f32.  Returns (out_f, out_b), each (Tp, B, H) f32."""
    Tp, B, H8 = xg.shape
    H = H8 // 8
    Tc = time_chunk
    num_chunks = Tp // Tc

    needed = (2 * 2 * (Tc * B * 4 * H * 4 + Tc * B * H * 4)   # xg halves + outputs, dbl-buf
              + 2 * 2 * H * 4 * H * 4                          # whh_f / whh_b
              + 4 * B * H * 4 + 2 * B * 128 * 4)               # scratch + lens
    vmem_limit = int(min(max(needed + (4 << 20), 32 << 20), 64 << 20))

    out_f, out_b = pl.pallas_call(
        _bilstm_chunk_kernel,
        out_shape=(jax.ShapeDtypeStruct((Tp, B, H), jnp.float32),
                   jax.ShapeDtypeStruct((Tp, B, H), jnp.float32)),
        grid_spec=pltpu.PrefetchScalarGridSpec(
            num_scalar_prefetch=0,
            grid=(num_chunks,),
            in_specs=[
                pl.BlockSpec((B, 1), lambda c: (0, 0)),                               # lens
                pl.BlockSpec((Tc, B, 4 * H), lambda c: (c, 0, 0)),                    # xg fwd
                pl.BlockSpec((Tc, B, 4 * H), lambda c: (num_chunks - 1 - c, 0, 1)),   # xg bwd
                pl.BlockSpec((H, 4 * H), lambda c: (0, 0)),                           # whh_f
                pl.BlockSpec((H, 4 * H), lambda c: (0, 0)),                           # whh_b
            ],
            out_specs=[
                pl.BlockSpec((Tc, B, H), lambda c: (c, 0, 0)),                        # out_f
                pl.BlockSpec((Tc, B, H), lambda c: (num_chunks - 1 - c, 0, 0)),       # out_b
            ],
            scratch_shapes=[
                pltpu.VMEM((B, H), jnp.float32),   # h fwd
                pltpu.VMEM((B, H), jnp.float32),   # c fwd
                pltpu.VMEM((B, H), jnp.float32),   # h bwd
                pltpu.VMEM((B, H), jnp.float32),   # c bwd
            ],
        ),
        compiler_params=pltpu.CompilerParams(
            dimension_semantics=("arbitrary",),    # state carries across time chunks
            vmem_limit_bytes=vmem_limit),
    )(lens_col, xg, xg, whh_f, whh_b)
    return out_f, out_b


# ----------------------------------------------------------------------------
# Parameter preparation (hoisted out of the forward path; run once).
# ----------------------------------------------------------------------------
def prepare_params(raw, *, mxu_dtype=jnp.bfloat16):
    H = raw["hidden_size"]
    layers = []
    for li, layer in enumerate(raw["layers"]):
        wf = jnp.asarray(layer["fwd"]["w_ih"], jnp.float32).T       # (in, 4H), cols [i|f|g|o]
        wb = jnp.asarray(layer["bwd"]["w_ih"], jnp.float32).T
        w_cat = jnp.concatenate([wf, wb], axis=1)                   # (in, 8H)
        b = jnp.concatenate([jnp.asarray(layer["fwd"]["b"], jnp.float32),
                             jnp.asarray(layer["bwd"]["b"], jnp.float32)]).reshape(1, 8 * H)
        if li == 0:
            w_in = [w_cat.astype(mxu_dtype)]
        else:
            # split along K: rows 0:H act on the fwd half of the layer input, H:2H on the bwd
            w_in = [w_cat[:H].astype(mxu_dtype), w_cat[H:].astype(mxu_dtype)]
        layers.append({
            "w_in": w_in,
            "b": b,
            "whh_f": jnp.asarray(layer["fwd"]["w_hh"], jnp.float32).T,   # (H, 4H)
            "whh_b": jnp.asarray(layer["bwd"]["w_hh"], jnp.float32).T,
        })
    wfc_t = jnp.asarray(raw["w_fc"], jnp.float32).T                 # (2H, OUT)
    return {"hidden_size": H, "layers": layers, "mxu_dtype": mxu_dtype,
            "w_fc": [wfc_t[:H], wfc_t[H:]], "out_size": int(wfc_t.shape[1])}


# ----------------------------------------------------------------------------
# WordLSTMEncoder forward
# ----------------------------------------------------------------------------
def word_lstm_encoder_forward(prepared, sents, sent_length, *, max_len=None):
    """sents: (B, T, input_size), sent_length: (B,) int -> (B, max_len, output_size)."""
    B, T, I = sents.shape
    H = prepared["hidden_size"]
    mxu_dtype = prepared["mxu_dtype"]
    B_pad = _round_up(B, 8)                               # f32 sublane size
    Tc = _choose_time_chunk(T, B_pad, H)
    Tp = _round_up(T, Tc)

    x = jnp.pad(sents.astype(jnp.float32), ((0, B_pad - B), (0, Tp - T), (0, 0)))
    lens = jnp.pad(sent_length.astype(jnp.int32), (0, B_pad - B)).reshape(B_pad, 1)

    # time-major once, on the narrow raw input; everything stays time-major until the fc.
    xs = [jnp.transpose(x, (1, 0, 2)).reshape(Tp * B_pad, I)]

    for layer in prepared["layers"]:
        # Hoisted input projection: one GEMM over all timesteps, both directions, all gates.
        xg = gemm_multi(xs, layer["w_in"], layer["b"], mxu_dtype=mxu_dtype)   # (Tp*B, 8H)
        xg = xg.reshape(Tp, B_pad, 8 * H)
        out_f, out_b = bilstm_recurrence(xg, lens, layer["whh_f"], layer["whh_b"], Tc)
        # no concat: the next GEMM consumes the pair with split-K weights
        xs = [out_f.reshape(Tp * B_pad, H), out_b.reshape(Tp * B_pad, H)]

    out_n = prepared["out_size"]
    feat = gemm_multi(xs, prepared["w_fc"], jnp.zeros((1, out_n), jnp.float32),
                      mxu_dtype=jnp.float32)              # fc is tiny; keep f32
    # transpose only the small OUT-wide result back to batch-first
    feat = jnp.transpose(feat.reshape(Tp, B_pad, out_n), (1, 0, 2))[:B]

    # pad_packed_sequence truncates the time dim to max(sent_length).
    # TODO(synk): dynamic max_len needs a host-static bound; when None, return full T.
    if max_len is None:
        max_len = T
    return feat[:, :max_len]


# ----------------------------------------------------------------------------
# Pure-JAX reference (lax.scan, f32) for the correctness check.
# ----------------------------------------------------------------------------
def _ref_lstm_dir(x_tbf, mask, w_ih, w_hh, b, reverse):
    T, B, _ = x_tbf.shape
    H = w_hh.shape[1]

    def step(carry, inp):
        h, c = carry
        x_t, m_t = inp
        gates = x_t @ w_ih.T + h @ w_hh.T + b
        i = jax.nn.sigmoid(gates[:, :H]); f = jax.nn.sigmoid(gates[:, H:2 * H])
        g = jnp.tanh(gates[:, 2 * H:3 * H]); o = jax.nn.sigmoid(gates[:, 3 * H:])
        c_new = f * c + i * g
        h_new = o * jnp.tanh(c_new)
        c2 = m_t * c_new + (1 - m_t) * c
        h2 = m_t * h_new + (1 - m_t) * h
        return (h2, c2), m_t * h_new

    xs = (x_tbf[::-1], mask[::-1]) if reverse else (x_tbf, mask)
    init = (jnp.zeros((B, H), jnp.float32), jnp.zeros((B, H), jnp.float32))
    _, outs = lax.scan(step, init, xs)
    return outs[::-1] if reverse else outs


def _reference_forward(params, sents, sent_length):
    B, T, _ = sents.shape
    t_idx = jnp.arange(T)[:, None]
    mask = (t_idx < sent_length[None, :]).astype(jnp.float32)[:, :, None]
    layer_in = jnp.transpose(sents, (1, 0, 2)).astype(jnp.float32)
    for layer in params["layers"]:
        f = _ref_lstm_dir(layer_in, mask, layer["fwd"]["w_ih"], layer["fwd"]["w_hh"],
                          layer["fwd"]["b"], False)
        bwd = _ref_lstm_dir(layer_in, mask, layer["bwd"]["w_ih"], layer["bwd"]["w_hh"],
                            layer["bwd"]["b"], True)
        layer_in = jnp.concatenate([f, bwd], axis=-1)
    lstm_out = jnp.transpose(layer_in, (1, 0, 2))
    return jnp.einsum("btd,od->bto", lstm_out, params["w_fc"])


# ----------------------------------------------------------------------------
# Deterministic parameter init (shapes from nn.LSTM / nn.Linear in __init__).
# ----------------------------------------------------------------------------
def init_params(key, input_size, hidden_size, num_layers, output_size):
    scale = 1.0 / np.sqrt(hidden_size)
    layers = []
    for l in range(num_layers):
        in_sz = input_size if l == 0 else 2 * hidden_size
        layer = {}
        for d in ("fwd", "bwd"):
            key, k1, k2, k3, k4 = jax.random.split(key, 5)
            w_ih = jax.random.uniform(k1, (4 * hidden_size, in_sz), jnp.float32, -scale, scale)
            w_hh = jax.random.uniform(k2, (4 * hidden_size, hidden_size), jnp.float32, -scale, scale)
            b_ih = jax.random.uniform(k3, (4 * hidden_size,), jnp.float32, -scale, scale)
            b_hh = jax.random.uniform(k4, (4 * hidden_size,), jnp.float32, -scale, scale)
            layer[d] = {"w_ih": w_ih, "w_hh": w_hh, "b": b_ih + b_hh}
        layers.append(layer)
    key, kf = jax.random.split(key)
    w_fc = jax.random.uniform(kf, (output_size, 2 * hidden_size), jnp.float32,
                              -1.0 / np.sqrt(2 * hidden_size), 1.0 / np.sqrt(2 * hidden_size))
    return {"hidden_size": hidden_size, "num_layers": num_layers,
            "layers": layers, "w_fc": w_fc}


if __name__ == "__main__":
    B, T, INPUT, HIDDEN, LAYERS, OUT = 4, 8, 16, 32, 2, 16

    key = jax.random.PRNGKey(0)
    kp, kx = jax.random.split(key)
    params = init_params(kp, INPUT, HIDDEN, LAYERS, OUT)
    prepared = prepare_params(params)                      # weight prep hoisted out of forward

    sents = jax.random.normal(kx, (B, T, INPUT), jnp.float32)
    sent_length = jnp.array([8, 5, 0, 3], jnp.int32)       # includes a zero-length sentence
    max_len = int(np.max(np.asarray(sent_length)))

    out = jax.block_until_ready(
        word_lstm_encoder_forward(prepared, sents, sent_length, max_len=max_len))
    ref = jax.block_until_ready(_reference_forward(params, sents, sent_length))[:, :max_len]

    # bf16 MXU operands in the input projections -> looser tolerance than pure f32
    np.testing.assert_allclose(np.asarray(out), np.asarray(ref), atol=3e-2, rtol=3e-2)

    # zero-length sentence must be all zeros (batch filtering + F.pad + unsort semantics)
    assert np.allclose(np.asarray(out)[2], 0.0)
    assert out.shape == (B, max_len, OUT)

    print("KERNEL_OK")
</pallas_src>

<mosaic_0001>
module attributes {stable_mosaic.version = 11 : i64} {
  func.func @kernel(%arg0: i32, %arg1: i32, %arg2: memref<64x16xbf16, #tpu.memory_space<vmem>>, %arg3: memref<16x256xbf16, #tpu.memory_space<vmem>>, %arg4: memref<1x256xf32, #tpu.memory_space<vmem>>, %arg5: memref<64x256xf32, #tpu.memory_space<vmem>>) attributes {dimension_semantics = [#tpu.dimension_semantics<parallel>, #tpu.dimension_semantics<parallel>], iteration_bounds = array<i64: 1, 1>, scalar_prefetch = 0 : i64, scratch_operands = 0 : i64, tpu.core_type = #tpu.core_type<tc>, window_params = [{transform_indices = @transform_0, window_bounds = array<i64: 64, 16>}, {transform_indices = @transform_1, window_bounds = array<i64: 16, 256>}, {transform_indices = @transform_2, window_bounds = array<i64: 1, 256>}, {transform_indices = @transform_3, window_bounds = array<i64: 64, 256>}]} {
    %c0 = arith.constant 0 : index
    %c0_0 = arith.constant 0 : index
    %0 = vector.load %arg2[%c0, %c0_0] : memref<64x16xbf16, #tpu.memory_space<vmem>>, vector<64x16xbf16>
    %c0_1 = arith.constant 0 : index
    %c0_2 = arith.constant 0 : index
    %1 = vector.load %arg3[%c0_1, %c0_2] : memref<16x256xbf16, #tpu.memory_space<vmem>>, vector<16x256xbf16>
    %cst = arith.constant dense<0.000000e+00> : vector<64x256xf32>
    %2 = tpu.matmul %0, %1, %cst {dimension_numbers = #tpu.dot_dimension_numbers<[1], [0], [0], [1], [0, 0, 1, 1], [], []>} : vector<64x16xbf16>, vector<16x256xbf16>, vector<64x256xf32> -> vector<64x256xf32>
    %c0_3 = arith.constant 0 : index
    %c0_4 = arith.constant 0 : index
    %3 = vector.load %arg4[%c0_3, %c0_4] : memref<1x256xf32, #tpu.memory_space<vmem>>, vector<1x256xf32>
    %4 = vector.broadcast %3 : vector<1x256xf32> to vector<64x256xf32>
    %5 = arith.addf %2, %4 : vector<64x256xf32>
    %c0_5 = arith.constant 0 : index
    %c0_6 = arith.constant 0 : index
    %6 = vector.load %arg5[%c0_5, %c0_6] : memref<64x256xf32, #tpu.memory_space<vmem>>, vector<64x256xf32>
    tpu.vector_store %arg5[%c0_5, %c0_6], %5 {strides = array<i32>} : memref<64x256xf32, #tpu.memory_space<vmem>>, vector<64x256xf32>,
    return
  }
  func.func @transform_0(%arg0: i32, %arg1: i32) -> (i32, i32) {
    %c0_i32 = arith.constant 0 : i32
    %c0_i32_0 = arith.constant 0 : i32
    return %arg0, %c0_i32 : i32, i32
  }
  func.func @transform_1(%arg0: i32, %arg1: i32) -> (i32, i32) {
    %c0_i32 = arith.constant 0 : i32
    %c0_i32_0 = arith.constant 0 : i32
    return %c0_i32, %arg1 : i32, i32
  }
  func.func @transform_2(%arg0: i32, %arg1: i32) -> (i32, i32) {
    %c0_i32 = arith.constant 0 : i32
    %c0_i32_0 = arith.constant 0 : i32
    return %c0_i32, %arg1 : i32, i32
  }
  func.func @transform_3(%arg0: i32, %arg1: i32) -> (i32, i32) {
    %c0_i32 = arith.constant 0 : i32
    return %arg0, %arg1 : i32, i32
  }
}

</mosaic_0001>

<llo_original>
// kernel: tpu_custom_call.1
$region0: #{tpu_custom_call.1}
  #allocation0 [shape = 'u32[]', space=smem, size = 0x4, offset = 0x4, fixed_abs, tag = 'smem constant byte address 0x4 - core index']
  #allocation1 [shape = 'u32[144,128]{1,0:T(1,128)}', space=vmem, size = 0x12000, scoped, tag = 'internal scratch']
  %s0 = inlined_call_operand.vmem [shape: bf16[64,16], index: 0, kind: input, shape index: {}]
  %s1 = inlined_call_operand.vmem [shape: bf16[16,256], index: 1, kind: input, shape index: {}]
  %s2 = inlined_call_operand.vmem [shape: f32[1,256], index: 2, kind: input, shape index: {}]
  %s3 = inlined_call_operand.hbm [shape: f32[64,256], index: 3, kind: output, shape index: {}]
  %s4 = sld [smem:[#allocation0]]
  $region22: #{tpu_custom_call.1} parent=0
    _
  %s6 = ssub.s32 1, %s4
  %s7 = scalar_select 0, %s6, %s4
  $region1: #{tpu_custom_call.1} parent=0
    #allocation2 [shape = 'u8[65536]{0}', space=vmem, size = 0x10000, scoped, tag = 'output window, operand 0, single buffered']
    #allocation3 [shape = 's32[1]{0}', space=sflag, size = 0x4, scoped, tag = 'scoped memory for tpu_custom_call.1']
    %8 = vsyncpa [#allocation3], 0
    // Predicated region
    $region2: #{tpu_custom_call.1} parent=1 // pred_check
      _
    $region3: #{tpu_custom_call.1} parent=1 // pred_check_branch
      %10 = sbr.rel (0) target = $region5
    $region4: #{tpu_custom_call.1} parent=1 // pred_region
      _
    $region5: #{tpu_custom_call.1} parent=1 // pred_fallthru
      _
    // Predicated region
    $region6: #{tpu_custom_call.1} parent=1 // pred_check
      _
    $region7: #{tpu_custom_call.1} parent=1 // pred_check_branch
      %12 = sbr.rel (0) target = $region9
    $region8: #{tpu_custom_call.1} parent=1 // pred_region
      _
    $region9: #{tpu_custom_call.1} parent=1 // pred_fallthru
      _
    // Predicated region
    $region10: #{tpu_custom_call.1} parent=1 // pred_check
      _
    $region11: #{tpu_custom_call.1} parent=1 // pred_check_branch
      %14 = sbr.rel (0) target = $region13
    $region12: #{tpu_custom_call.1} parent=1 // pred_region
      _
    $region13: #{tpu_custom_call.1} parent=1 // pred_fallthru
      _
    %v16 = vld [vmem:[%s0] sm:$0xf]
    %v17 = vld [vmem:[%s0 + $0x4] sm:$0xf]
    %v18 = vld [vmem:[%s0 + $0x8] sm:$0xf]
    %v19 = vld [vmem:[%s0 + $0xc] sm:$0xf]
    %v20 = vld [vmem:[%s0 + $0x10] sm:$0xf]
    %v21 = vld [vmem:[%s0 + $0x14] sm:$0xf]
    %v22 = vld [vmem:[%s0 + $0x18] sm:$0xf]
    %v23 = vld [vmem:[%s0 + $0x1c] sm:$0xf]
    %v24 = vld [vmem:[%s1] sm:$0xff]
    %v25 = vld [vmem:[%s1 + $0x8] sm:$0xff]
    %v26 = vld [vmem:[%s2] sm:$0x3]
    %v28 = vlaneseq
    %v29 = vshrl.u32 %v28, 7
    %v30 = vsub.s32 0, %v29
    %v31 = vrot.slane %v26, %v30
    %v32 = vlaneseq
    %v33 = vshrl.u32 %v32, 7
    %v34 = vsub.s32 1, %v33
    %v35 = vrot.slane %v26, %v34
    %v46 = vunpack.c.l.b16 %v16
    %v47 = vunpack.c.l.b16 %v17
    %v48 = vunpack.c.l.b16 %v18
    %v49 = vunpack.c.l.b16 %v19
    %v50 = vunpack.c.l.b16 %v20
    %v51 = vunpack.c.l.b16 %v21
    %v52 = vunpack.c.l.b16 %v22
    %v53 = vunpack.c.l.b16 %v23
    %v54 = vpack.c.b16 %v47, %v46
    %v55 = vpack.c.b16 %v49, %v48
    %v56 = vpack.c.b16 %v51, %v50
    %v57 = vpack.c.b16 %v53, %v52
    %v60 = vunpack.c.l.b16 %v24
    %v61 = vunpack.c.h.b16 %v24
    %v62 = vunpack.c.l.b16 %v25
    %v63 = vunpack.c.h.b16 %v25
    %v64 = vpack.c.b16 %v62, %v60
    %v65 = vpack.c.b16 %v63, %v61
    %vm68 = vcmask 130048
    %v70 = vsel %vm68, %v54, 0
    %v73 = vsel %vm68, %v55, 0
    %v76 = vsel %vm68, %v56, 0
    %v79 = vsel %vm68, %v57, 0
    %81 = vmatprep.subr.bf16.mxu0 %v65
    %82 = vmatpush1.bf16.msra.mxu0 %v64
    %83 = vmatprep.subr.bf16.mxu0 0
    %84 = vmatpush1.bf16.msra.mxu0 0
    %85 = vmatprep.subr.bf16.mxu0 0
    %86 = vmatpush1.bf16.msra.mxu0 0
    %87 = vmatprep.subr.bf16.mxu0 0
    %88 = vmatpush1.bf16.msra.mxu0 0
    %89 = vmatprep.subr.bf16.mxu0 0
    %90 = vmatpush1.bf16.msra.mxu0 0
    %91 = vmatprep.subr.bf16.mxu0 0
    %92 = vmatpush1.bf16.msra.mxu0 0
    %93 = vmatprep.subr.bf16.mxu0 0
    %94 = vmatpush1.bf16.msra.mxu0 0
    %95 = vmatprep.subr.bf16.mxu0 0
    %96 = vmatpush1.bf16.msra.mxu0 0
    %97 = vmatprep.subr.bf16.mxu0 0
    %98 = vmatpush1.bf16.msra.mxu0 0
    %99 = vmatprep.subr.bf16.mxu0 0
    %100 = vmatpush1.bf16.msra.mxu0 0
    %101 = vmatprep.subr.bf16.mxu0 0
    %102 = vmatpush1.bf16.msra.mxu0 0
    %103 = vmatprep.subr.bf16.mxu0 0
    %104 = vmatpush1.bf16.msra.mxu0 0
    %105 = vmatprep.subr.bf16.mxu0 0
    %106 = vmatpush1.bf16.msra.mxu0 0
    %107 = vmatprep.subr.bf16.mxu0 0
    %108 = vmatpush1.bf16.msra.mxu0 0
    %109 = vmatprep.subr.bf16.mxu0 0
    %110 = vmatpush1.bf16.msra.mxu0 0
    %111 = vmatprep.subr.bf16.mxu0 0
    %112 = vmatpush1.bf16.msra.mxu0 0
    %113 = vmatprep.mubr.bf16.mxu0 0
    %114 = vmatmul.mubr.bf16.gmra.mrb[0].mxu0 %v70
    %v115 = vpop.f32.mrb[0].mxu0
    %v116 = vadd.f32 %v31, %v115
    %v117 = vpop.f32.mrb[0].mxu0
    %v118 = vadd.f32 %v35, %v117
    %v119 = vpop.f32.mrb[0].mxu0
    %v120 = vadd.f32 %v31, %v119
    %v121 = vpop.f32.mrb[0].mxu0
    %v122 = vadd.f32 %v35, %v121
    %123 = vmatprep.mubr.bf16.mxu0 0
    %124 = vmatmul.mubr.bf16.gmra.mrb[0].mxu0 %v73
    %v125 = vpop.f32.mrb[0].mxu0
    %v126 = vadd.f32 %v31, %v125
    %v127 = vpop.f32.mrb[0].mxu0
    %v128 = vadd.f32 %v35, %v127
    %v129 = vpop.f32.mrb[0].mxu0
    %v130 = vadd.f32 %v31, %v129
    %v131 = vpop.f32.mrb[0].mxu0
    %v132 = vadd.f32 %v35, %v131
    %133 = vmatprep.mubr.bf16.mxu0 0
    %134 = vmatmul.mubr.bf16.gmra.mrb[0].mxu0 %v76
    %v135 = vpop.f32.mrb[0].mxu0
    %v136 = vadd.f32 %v31, %v135
    %v137 = vpop.f32.mrb[0].mxu0
    %v138 = vadd.f32 %v35, %v137
    %v139 = vpop.f32.mrb[0].mxu0
    %v140 = vadd.f32 %v31, %v139
    %v141 = vpop.f32.mrb[0].mxu0
    %v142 = vadd.f32 %v35, %v141
    %143 = vmatprep.mubr.bf16.mxu0 0
    %144 = vmatmul.mubr.bf16.gmra.mrb[0].mxu0 %v79
    %v145 = vpop.f32.mrb[0].mxu0
    %v146 = vadd.f32 %v31, %v145
    %v147 = vpop.f32.mrb[0].mxu0
    %v148 = vadd.f32 %v35, %v147
    %v149 = vpop.f32.mrb[0].mxu0
    %v150 = vadd.f32 %v31, %v149
    %v151 = vpop.f32.mrb[0].mxu0
    %v152 = vadd.f32 %v35, %v151
    %153 = vdwg.mxu0
    %154 = vst [vmem:[#allocation2] sm:$0xff] %v116
    %155 = vst [vmem:[#allocation2 + $0x8] sm:$0xff] %v118
    %156 = vst [vmem:[#allocation2 + $0x10] sm:$0xff] %v120
    %157 = vst [vmem:[#allocation2 + $0x18] sm:$0xff] %v122
    %158 = vst [vmem:[#allocation2 + $0x20] sm:$0xff] %v126
    %159 = vst [vmem:[#allocation2 + $0x28] sm:$0xff] %v128
    %160 = vst [vmem:[#allocation2 + $0x30] sm:$0xff] %v130
    %161 = vst [vmem:[#allocation2 + $0x38] sm:$0xff] %v132
    %162 = vst [vmem:[#allocation2 + $0x40] sm:$0xff] %v136
    %163 = vst [vmem:[#allocation2 + $0x48] sm:$0xff] %v138
    %164 = vst [vmem:[#allocation2 + $0x50] sm:$0xff] %v140
    %165 = vst [vmem:[#allocation2 + $0x58] sm:$0xff] %v142
    %166 = vst [vmem:[#allocation2 + $0x60] sm:$0xff] %v146
    %167 = vst [vmem:[#allocation2 + $0x68] sm:$0xff] %v148
    %168 = vst [vmem:[#allocation2 + $0x70] sm:$0xff] %v150
    %169 = vst [vmem:[#allocation2 + $0x78] sm:$0xff] %v152
    // Predicated region
    $region14: #{tpu_custom_call.1} parent=1 // pred_check
      _
    $region15: #{tpu_custom_call.1} parent=1 // pred_check_branch
      %171 = sbr.rel (0) target = $region17
    $region16: #{tpu_custom_call.1} parent=1 // pred_region
      %s173 = ssub.s32 2048, 2048
      %174 = vsyncadd [#allocation3], %s173
      %s175 = sshll.u32 [#allocation2], 4
      %s176 = int_to_ptr.vmem [resolvable:$true] %s175
      %181 = dma.vmem_to_hbm [thread:$0]  %s176, 2048, %s3, [#allocation3], 256, 256, 16
    $region17: #{tpu_custom_call.1} parent=1 // pred_fallthru
      _
    // Predicated region
    $region18: #{tpu_custom_call.1} parent=1 // pred_check
      _
    $region19: #{tpu_custom_call.1} parent=1 // pred_check_branch
      %183 = sbr.rel (0) target = $region21
    $region20: #{tpu_custom_call.1} parent=1 // pred_region
      %184 = dma.done [#allocation3], 2048
    $region21: #{tpu_custom_call.1} parent=1 // pred_fallthru
      _
    %185 = vsyncpa [#allocation3], 1

</llo_original>
